<compile_context>
chip_gen: v7x
topology: tpu7x:2x2x1
jax: 0.10.0
libtpu: 0.0.40
codegen_flags: <defaults>
</compile_context>

<pallas_src>
import jax
import jax.numpy as jnp
from jax.experimental import pallas as pl
from jax.experimental.pallas import tpu as pltpu

_LN2 = 0.6931471805599453
_BIG = 4.0e9  # above this sqrt(x^2+1) == |x| in f32; also avoids trusting x*x (inf)


def _asinh_kernel(x_ref, o_ref):
    x = x_ref[...].astype(jnp.float32)
    ax = jnp.abs(x)
    t = ax * ax
    big = ax > _BIG
    # moderate |x|: asinh(|x|) = log1p(|x| + x^2 / (1 + sqrt(x^2 + 1)))
    # huge     |x|: asinh(|x|) ~= log(|x|) + ln2 = log1p(|x| - 1) + ln2
    # -> one shared log1p; the huge-branch garbage (inf/inf = NaN) in the
    #    unselected lane of the where is discarded, no FP traps on TPU.
    s = jnp.where(big, ax - 1.0, ax + t / (1.0 + jnp.sqrt(t + 1.0)))
    y = jnp.log1p(s) + jnp.where(big, _LN2, 0.0)
    o_ref[...] = jnp.copysign(y, x).astype(o_ref.dtype)


def _pick_lane_width(n):
    """Largest lane width (multiple of 128) that divides n exactly, else None."""
    for cand in (4096, 2048, 1024, 512, 256, 128):
        if n % cand == 0:
            return cand
    return None


def _asinh_2d(x2d, out_dtype):
    """Run the asinh kernel over a lane-dense (rows, L) slab."""
    rows, L = x2d.shape
    in_item = jnp.dtype(x2d.dtype).itemsize
    out_item = jnp.dtype(out_dtype).itemsize
    itemsize = max(in_item, out_item)
    sub_q = max(8, 32 // max(in_item, 1))  # 8 (f32) / 16 (bf16) / 32 (i8)

    # ~4 MiB per block; double-buffered in+out => ~16 MiB VMEM.
    target_bytes = 4 << 20
    tr = max(sub_q, (target_bytes // (L * itemsize)) // sub_q * sub_q)
    # Guarantee >= 2 grid programs when possible so both v7x TCs get work.
    if rows > sub_q:
        half = max(sub_q, (rows // 2) // sub_q * sub_q)
        tr = min(tr, half)
    tile_rows = rows if tr >= rows else tr
    grid = (pl.cdiv(rows, tile_rows),)

    n = rows * L
    cost = pl.CostEstimate(
        flops=12 * n,
        transcendentals=3 * n,
        bytes_accessed=n * (in_item + out_item),
    )

    return pl.pallas_call(
        _asinh_kernel,
        out_shape=jax.ShapeDtypeStruct((rows, L), out_dtype),
        grid=grid,
        in_specs=[pl.BlockSpec((tile_rows, L), lambda i: (i, 0))],
        out_specs=pl.BlockSpec((tile_rows, L), lambda i: (i, 0)),
        compiler_params=pltpu.CompilerParams(
            dimension_semantics=("parallel",),
            vmem_limit_bytes=32 << 20,  # headroom past v5e's 16 MiB scoped default
        ),
        cost_estimate=cost,
    )(x2d)


def asinh_pallas(x, *, min_pallas_elems=1 << 16):
    """Elementwise asinh matching torch.asinh semantics (shape preserved,
    float dtypes preserved, integer inputs promoted to float32)."""
    out_dtype = x.dtype if jnp.issubdtype(x.dtype, jnp.floating) else jnp.float32
    n = x.size

    # Tiny inputs: a fused XLA elementwise op beats kernel launch + grid setup.
    if n == 0 or n < min_pallas_elems:
        return jnp.arcsinh(x).astype(out_dtype)

    L = _pick_lane_width(n)
    if L is not None:
        rows = n // L
        y2d = _asinh_2d(x.reshape(rows, L), out_dtype)  # metadata-only reshape
        return y2d.reshape(x.shape)

    # Ragged numel (not a multiple of 128): run the kernel on the aligned body,
    # compute the short tail with XLA. Avoids pad + post-slice HBM passes.
    body = (n // 128) * 128
    flat = x.reshape(-1)
    if body == 0:
        return jnp.arcsinh(x).astype(out_dtype)
    Lb = _pick_lane_width(body)
    y_body = _asinh_2d(flat[:body].reshape(body // Lb, Lb), out_dtype).reshape(-1)
    y_tail = jnp.arcsinh(flat[body:]).astype(out_dtype)
    return jnp.concatenate([y_body, y_tail]).reshape(x.shape)


if __name__ == "__main__":
    key = jax.random.PRNGKey(0)
    k1, k2, k3, k4 = jax.random.split(key, 4)

    # Module-implied small NCHW shape; force the Pallas path so the kernel runs.
    x = jax.random.normal(k1, (2, 4, 16, 16), dtype=jnp.float32) * 3.0
    y = asinh_pallas(x, min_pallas_elems=0)
    jax.block_until_ready(y)
    y_ref = jnp.arcsinh(x)
    assert y.shape == x.shape and y.dtype == x.dtype
    assert jnp.max(jnp.abs(y - y_ref)) < 1e-5

    # Larger f32 input: exercises the multi-block, >=2-program parallel grid.
    x_big = jax.random.normal(k2, (8, 16, 64, 64), dtype=jnp.float32) * 10.0
    y_big = asinh_pallas(x_big, min_pallas_elems=0)
    jax.block_until_ready(y_big)
    assert jnp.max(jnp.abs(y_big - jnp.arcsinh(x_big))) < 1e-5

    # bf16: kernel streams bf16 in/out directly, computes in f32.
    x_bf = (jax.random.normal(k3, (4, 8, 32, 32)) * 5.0).astype(jnp.bfloat16)
    y_bf = asinh_pallas(x_bf, min_pallas_elems=0)
    jax.block_until_ready(y_bf)
    ref_bf = jnp.arcsinh(x_bf.astype(jnp.float32))
    assert y_bf.dtype == jnp.bfloat16
    assert jnp.max(jnp.abs(y_bf.astype(jnp.float32) - ref_bf)) < 5e-2

    # Ragged numel (130*130 = 16900, not a multiple of 128): body+tail path.
    x_rag = jax.random.normal(k4, (130, 130), dtype=jnp.float32) * 4.0
    y_rag = asinh_pallas(x_rag, min_pallas_elems=0)
    jax.block_until_ready(y_rag)
    assert y_rag.shape == x_rag.shape
    assert jnp.max(jnp.abs(y_rag - jnp.arcsinh(x_rag))) < 1e-5

    # Default small-input fast path (no pallas launch).
    y_small = asinh_pallas(x)
    jax.block_until_ready(y_small)
    assert jnp.max(jnp.abs(y_small - y_ref)) < 1e-5

    print("KERNEL_OK")
</pallas_src>

<mosaic_0001>
module attributes {stable_mosaic.version = 11 : i64} {
  func.func @_asinh_kernel(%arg0: i32, %arg1: memref<1x2048xf32, #tpu.memory_space<vmem>>, %arg2: memref<1x2048xf32, #tpu.memory_space<vmem>>) attributes {dimension_semantics = [#tpu.dimension_semantics<parallel>], iteration_bounds = array<i64: 1>, scalar_prefetch = 0 : i64, scratch_operands = 0 : i64, tpu.core_type = #tpu.core_type<tc>, window_params = [{transform_indices = @transform_0, window_bounds = array<i64: 1, 2048>}, {transform_indices = @transform_1, window_bounds = array<i64: 1, 2048>}]} {
    %c0 = arith.constant 0 : index
    %c0_0 = arith.constant 0 : index
    %0 = vector.load %arg1[%c0, %c0_0] : memref<1x2048xf32, #tpu.memory_space<vmem>>, vector<1x2048xf32>
    %1 = math.absf %0 : vector<1x2048xf32>
    %2 = arith.mulf %1, %1 : vector<1x2048xf32>
    %cst = arith.constant 4.000000e+09 : f32
    %3 = vector.broadcast %cst : f32 to vector<1x2048xf32>
    %4 = arith.cmpf ogt, %1, %3 : vector<1x2048xf32>
    %cst_1 = arith.constant 1.000000e+00 : f32
    %5 = vector.broadcast %cst_1 : f32 to vector<1x2048xf32>
    %6 = arith.subf %1, %5 : vector<1x2048xf32>
    %cst_2 = arith.constant 1.000000e+00 : f32
    %7 = vector.broadcast %cst_2 : f32 to vector<1x2048xf32>
    %8 = arith.addf %2, %7 : vector<1x2048xf32>
    %9 = math.sqrt %8 : vector<1x2048xf32>
    %cst_3 = arith.constant 1.000000e+00 : f32
    %10 = vector.broadcast %cst_3 : f32 to vector<1x2048xf32>
    %11 = arith.addf %10, %9 : vector<1x2048xf32>
    %12 = arith.divf %2, %11 : vector<1x2048xf32>
    %13 = arith.addf %1, %12 : vector<1x2048xf32>
    %14 = arith.select %4, %6, %13 : vector<1x2048xi1>, vector<1x2048xf32>
    %15 = math.log1p %14 : vector<1x2048xf32>
    %cst_4 = arith.constant 0.693147182 : f32
    %cst_5 = arith.constant 0.000000e+00 : f32
    %16 = vector.broadcast %cst_4 : f32 to vector<1x2048xf32>
    %17 = vector.broadcast %cst_5 : f32 to vector<1x2048xf32>
    %18 = arith.select %4, %16, %17 : vector<1x2048xi1>, vector<1x2048xf32>
    %19 = arith.addf %15, %18 : vector<1x2048xf32>
    %20 = tpu.bitcast %0 : vector<1x2048xf32> -> vector<1x2048xi32>
    %c31_i32 = arith.constant 31 : i32
    %21 = vector.broadcast %c31_i32 : i32 to vector<1x2048xi32>
    %22 = arith.shrsi %20, %21 : vector<1x2048xi32>
    %c0_i32 = arith.constant 0 : i32
    %23 = vector.broadcast %c0_i32 : i32 to vector<1x2048xi32>
    %24 = arith.cmpi ne, %22, %23 : vector<1x2048xi32>
    %25 = math.absf %19 : vector<1x2048xf32>
    %cst_6 = arith.constant 0.000000e+00 : f32
    %26 = vector.broadcast %cst_6 : f32 to vector<1x2048xf32>
    %27 = arith.subf %26, %25 : vector<1x2048xf32>
    %28 = math.absf %19 : vector<1x2048xf32>
    %29 = arith.select %24, %27, %28 : vector<1x2048xi1>, vector<1x2048xf32>
    %c0_7 = arith.constant 0 : index
    %c0_8 = arith.constant 0 : index
    %30 = vector.load %arg2[%c0_7, %c0_8] : memref<1x2048xf32, #tpu.memory_space<vmem>>, vector<1x2048xf32>
    tpu.vector_store %arg2[%c0_7, %c0_8], %29 {strides = array<i32>} : memref<1x2048xf32, #tpu.memory_space<vmem>>, vector<1x2048xf32>,
    return
  }
  func.func @transform_0(%arg0: i32) -> (i32, i32) {
    %c0_i32 = arith.constant 0 : i32
    %c0_i32_0 = arith.constant 0 : i32
    return %arg0, %c0_i32 : i32, i32
  }
  func.func @transform_1(%arg0: i32) -> (i32, i32) {
    %c0_i32 = arith.constant 0 : i32
    %c0_i32_0 = arith.constant 0 : i32
    return %arg0, %c0_i32 : i32, i32
  }
}

</mosaic_0001>

<llo_original>
// kernel: tpu_custom_call.1
$region0: #{tpu_custom_call.1}
  #allocation0 [shape = 'u32[]', space=smem, size = 0x4, offset = 0x4, fixed_abs, tag = 'smem constant byte address 0x4 - core index']
  #allocation1 [shape = 'u32[144,128]{1,0:T(1,128)}', space=vmem, size = 0x12000, scoped, tag = 'internal scratch']
  %s0 = inlined_call_operand.hbm [shape: f32[1,2048], index: 0, kind: input, shape index: {}]
  %s1 = inlined_call_operand.hbm [shape: f32[1,2048], index: 1, kind: output, shape index: {}]
  %s2 = sld [smem:[#allocation0]]
  $region18: #{tpu_custom_call.1} parent=0
    _
  %s4 = ssub.s32 1, %s2
  %s5 = scalar_select 0, %s4, %s2
  $region1: #{tpu_custom_call.1} parent=0
    #allocation2 [shape = 'u8[8192]{0}', space=vmem, size = 0x2000, scoped, tag = 'input window, operand 0, single buffered']
    #allocation3 [shape = 's32[1]{0}', space=sflag, size = 0x4, scoped, tag = 'scoped memory for tpu_custom_call.1']
    #allocation4 [shape = 's32[1]{0}', space=sflag, size = 0x4, scoped, tag = 'scoped memory for tpu_custom_call.1']
    #allocation5 [shape = 'u8[8192]{0}', space=vmem, size = 0x2000, scoped, tag = 'output window, operand 0, single buffered']
    %6 = vsyncpa [#allocation3], 0
    %7 = vsyncpa [#allocation4], 0
    // Predicated region
    $region2: #{tpu_custom_call.1} parent=1 // pred_check
      _
    $region3: #{tpu_custom_call.1} parent=1 // pred_check_branch
      %9 = sbr.rel (0) target = $region5
    $region4: #{tpu_custom_call.1} parent=1 // pred_region
      %s11 = ssub.s32 256, 256
      %12 = vsyncadd [#allocation3], %s11
      %s14 = sshll.u32 [#allocation2], 4
      %s15 = int_to_ptr.vmem [resolvable:$true] %s14
      %17 = dma.hbm_to_vmem [thread:$0]  %s0, 256, %s15, [#allocation3]
    $region5: #{tpu_custom_call.1} parent=1 // pred_fallthru
      _
    // Predicated region
    $region6: #{tpu_custom_call.1} parent=1 // pred_check
      _
    $region7: #{tpu_custom_call.1} parent=1 // pred_check_branch
      %19 = sbr.rel (0) target = $region9
    $region8: #{tpu_custom_call.1} parent=1 // pred_region
      %20 = dma.done [#allocation3], 256
    $region9: #{tpu_custom_call.1} parent=1 // pred_fallthru
      _
    %v21 = vld [vmem:[#allocation2] sm:$0xff]
    %v22 = vld [vmem:[#allocation2 + $0x8] sm:$0xff]
    %v23 = vand.u32 2147483647, %v21
    %v24 = vand.u32 2147483647, %v22
    %v25 = vmul.f32 %v23, %v23
    %v26 = vmul.f32 %v24, %v24
    %vm27 = vcmp.gt.f32.partialorder %v23, 4e+09
    %vm28 = vcmp.gt.f32.partialorder %v24, 4e+09
    %v29 = vsub.f32 %v23, 1.0
    %v30 = vsub.f32 %v24, 1.0
    %v31 = vadd.f32 %v25, 1.0
    %v32 = vadd.f32 %v26, 1.0
    %v33 = vrsqrt.pop %v31
    %v34 = vmul.f32 %v31, %v33
    %vm35 = vcmp.eq.f32.partialorder %v31, inf
    %v36 = vsel %vm35, %v31, %v34
    %vm37 = vcmp.eq.f32.partialorder %v31, 0.0
    %v38 = vand.u32 %v31, 2147483648
    %v39 = vsel %vm37, %v38, %v36
    %v40 = vrsqrt.pop %v32
    %v41 = vmul.f32 %v32, %v40
    %vm42 = vcmp.eq.f32.partialorder %v32, inf
    %v43 = vsel %vm42, %v32, %v41
    %vm44 = vcmp.eq.f32.partialorder %v32, 0.0
    %v45 = vand.u32 %v32, 2147483648
    %v46 = vsel %vm44, %v45, %v43
    %v47 = vadd.f32 %v39, 1.0
    %v48 = vadd.f32 %v46, 1.0
    %v49 = vrcp.pop %v47
    %v50 = vmul.f32 %v25, %v49
    %v51 = vrcp.pop %v48
    %v52 = vmul.f32 %v26, %v51
    %v53 = vadd.f32 %v23, %v50
    %v54 = vadd.f32 %v24, %v52
    %v55 = vsel %vm27, %v29, %v53
    %v56 = vsel %vm28, %v30, %v54
    %v57 = vadd.f32 %v55, 1.0
    %v58 = vlog2.pop %v57
    %v59 = vmul.f32 %v58, 0.6931472
    %v60 = vmul.f32 -0.5, %v55
    %v61 = vadd.f32 %v60, 1.0
    %v62 = vmul.f32 %v61, %v55
    %v63 = vand.u32 2147483647, %v55
    %vm64 = vcmp.lt.f32.partialorder %v63, 0.0004427343
    %v65 = vsel %vm64, %v62, %v59
    %v66 = vadd.f32 %v56, 1.0
    %v67 = vlog2.pop %v66
    %v68 = vmul.f32 %v67, 0.6931472
    %v69 = vmul.f32 -0.5, %v56
    %v70 = vadd.f32 %v69, 1.0
    %v71 = vmul.f32 %v70, %v56
    %v72 = vand.u32 2147483647, %v56
    %vm73 = vcmp.lt.f32.partialorder %v72, 0.0004427343
    %v74 = vsel %vm73, %v71, %v68
    %v75 = vsel %vm27, 0.6931472, 0.0
    %v76 = vsel %vm28, 0.6931472, 0.0
    %v77 = vadd.f32 %v65, %v75
    %v78 = vadd.f32 %v74, %v76
    %v81 = vlaneseq
    %v82 = vshrl.u32 %v81, 7
    %v83 = vsub.s32 0, %v82
    %v84 = vrot.slane %v21, %v83
    %v85 = vlaneseq
    %v86 = vshrl.u32 %v85, 7
    %v87 = vsub.s32 1, %v86
    %v88 = vrot.slane %v21, %v87
    %v89 = vlaneseq
    %v90 = vshrl.u32 %v89, 7
    %v91 = vsub.s32 2, %v90
    %v92 = vrot.slane %v21, %v91
    %v93 = vlaneseq
    %v94 = vshrl.u32 %v93, 7
    %v95 = vsub.s32 3, %v94
    %v96 = vrot.slane %v21, %v95
    %v97 = vlaneseq
    %v98 = vshrl.u32 %v97, 7
    %v99 = vsub.s32 4, %v98
    %v100 = vrot.slane %v21, %v99
    %v101 = vlaneseq
    %v102 = vshrl.u32 %v101, 7
    %v103 = vsub.s32 5, %v102
    %v104 = vrot.slane %v21, %v103
    %v105 = vlaneseq
    %v106 = vshrl.u32 %v105, 7
    %v107 = vsub.s32 6, %v106
    %v108 = vrot.slane %v21, %v107
    %v109 = vlaneseq
    %v110 = vshrl.u32 %v109, 7
    %v111 = vsub.s32 7, %v110
    %v112 = vrot.slane %v21, %v111
    %v113 = vlaneseq
    %v114 = vshrl.u32 %v113, 7
    %v115 = vsub.s32 0, %v114
    %v116 = vrot.slane %v22, %v115
    %v117 = vlaneseq
    %v118 = vshrl.u32 %v117, 7
    %v119 = vsub.s32 1, %v118
    %v120 = vrot.slane %v22, %v119
    %v121 = vlaneseq
    %v122 = vshrl.u32 %v121, 7
    %v123 = vsub.s32 2, %v122
    %v124 = vrot.slane %v22, %v123
    %v125 = vlaneseq
    %v126 = vshrl.u32 %v125, 7
    %v127 = vsub.s32 3, %v126
    %v128 = vrot.slane %v22, %v127
    %v129 = vlaneseq
    %v130 = vshrl.u32 %v129, 7
    %v131 = vsub.s32 4, %v130
    %v132 = vrot.slane %v22, %v131
    %v133 = vlaneseq
    %v134 = vshrl.u32 %v133, 7
    %v135 = vsub.s32 5, %v134
    %v136 = vrot.slane %v22, %v135
    %v137 = vlaneseq
    %v138 = vshrl.u32 %v137, 7
    %v139 = vsub.s32 6, %v138
    %v140 = vrot.slane %v22, %v139
    %v141 = vlaneseq
    %v142 = vshrl.u32 %v141, 7
    %v143 = vsub.s32 7, %v142
    %v144 = vrot.slane %v22, %v143
    %v145 = vshra.s32 %v84, 31
    %v146 = vshra.s32 %v88, 31
    %v147 = vshra.s32 %v92, 31
    %v148 = vshra.s32 %v96, 31
    %v149 = vshra.s32 %v100, 31
    %v150 = vshra.s32 %v104, 31
    %v151 = vshra.s32 %v108, 31
    %v152 = vshra.s32 %v112, 31
    %v153 = vshra.s32 %v116, 31
    %v154 = vshra.s32 %v120, 31
    %v155 = vshra.s32 %v124, 31
    %v156 = vshra.s32 %v128, 31
    %v157 = vshra.s32 %v132, 31
    %v158 = vshra.s32 %v136, 31
    %v159 = vshra.s32 %v140, 31
    %v160 = vshra.s32 %v144, 31
    %vm161 = vcmp.ne.s32.totalorder %v145, 0
    %vm162 = vcmp.ne.s32.totalorder %v146, 0
    %vm163 = vcmp.ne.s32.totalorder %v147, 0
    %vm164 = vcmp.ne.s32.totalorder %v148, 0
    %vm165 = vcmp.ne.s32.totalorder %v149, 0
    %vm166 = vcmp.ne.s32.totalorder %v150, 0
    %vm167 = vcmp.ne.s32.totalorder %v151, 0
    %vm168 = vcmp.ne.s32.totalorder %v152, 0
    %vm169 = vcmp.ne.s32.totalorder %v153, 0
    %vm170 = vcmp.ne.s32.totalorder %v154, 0
    %vm171 = vcmp.ne.s32.totalorder %v155, 0
    %vm172 = vcmp.ne.s32.totalorder %v156, 0
    %vm173 = vcmp.ne.s32.totalorder %v157, 0
    %vm174 = vcmp.ne.s32.totalorder %v158, 0
    %vm175 = vcmp.ne.s32.totalorder %v159, 0
    %vm176 = vcmp.ne.s32.totalorder %v160, 0
    %v177 = vand.u32 2147483647, %v77
    %v178 = vand.u32 2147483647, %v78
    %v179 = vsub.f32 0.0, %v177
    %v180 = vsub.f32 0.0, %v178
    %v183 = vlaneseq
    %v184 = vshrl.u32 %v183, 7
    %v185 = vsub.s32 0, %v184
    %v186 = vrot.slane %v179, %v185
    %v187 = vlaneseq
    %v188 = vshrl.u32 %v187, 7
    %v189 = vsub.s32 1, %v188
    %v190 = vrot.slane %v179, %v189
    %v191 = vlaneseq
    %v192 = vshrl.u32 %v191, 7
    %v193 = vsub.s32 2, %v192
    %v194 = vrot.slane %v179, %v193
    %v195 = vlaneseq
    %v196 = vshrl.u32 %v195, 7
    %v197 = vsub.s32 3, %v196
    %v198 = vrot.slane %v179, %v197
    %v199 = vlaneseq
    %v200 = vshrl.u32 %v199, 7
    %v201 = vsub.s32 4, %v200
    %v202 = vrot.slane %v179, %v201
    %v203 = vlaneseq
    %v204 = vshrl.u32 %v203, 7
    %v205 = vsub.s32 5, %v204
    %v206 = vrot.slane %v179, %v205
    %v207 = vlaneseq
    %v208 = vshrl.u32 %v207, 7
    %v209 = vsub.s32 6, %v208
    %v210 = vrot.slane %v179, %v209
    %v211 = vlaneseq
    %v212 = vshrl.u32 %v211, 7
    %v213 = vsub.s32 7, %v212
    %v214 = vrot.slane %v179, %v213
    %v215 = vlaneseq
    %v216 = vshrl.u32 %v215, 7
    %v217 = vsub.s32 0, %v216
    %v218 = vrot.slane %v180, %v217
    %v219 = vlaneseq
    %v220 = vshrl.u32 %v219, 7
    %v221 = vsub.s32 1, %v220
    %v222 = vrot.slane %v180, %v221
    %v223 = vlaneseq
    %v224 = vshrl.u32 %v223, 7
    %v225 = vsub.s32 2, %v224
    %v226 = vrot.slane %v180, %v225
    %v227 = vlaneseq
    %v228 = vshrl.u32 %v227, 7
    %v229 = vsub.s32 3, %v228
    %v230 = vrot.slane %v180, %v229
    %v231 = vlaneseq
    %v232 = vshrl.u32 %v231, 7
    %v233 = vsub.s32 4, %v232
    %v234 = vrot.slane %v180, %v233
    %v235 = vlaneseq
    %v236 = vshrl.u32 %v235, 7
    %v237 = vsub.s32 5, %v236
    %v238 = vrot.slane %v180, %v237
    %v239 = vlaneseq
    %v240 = vshrl.u32 %v239, 7
    %v241 = vsub.s32 6, %v240
    %v242 = vrot.slane %v180, %v241
    %v243 = vlaneseq
    %v244 = vshrl.u32 %v243, 7
    %v245 = vsub.s32 7, %v244
    %v246 = vrot.slane %v180, %v245
    %v265 = vlaneseq
    %v266 = vshrl.u32 %v265, 7
    %v267 = vsub.s32 0, %v266
    %v268 = vrot.slane %v177, %v267
    %v269 = vlaneseq
    %v270 = vshrl.u32 %v269, 7
    %v271 = vsub.s32 1, %v270
    %v272 = vrot.slane %v177, %v271
    %v273 = vlaneseq
    %v274 = vshrl.u32 %v273, 7
    %v275 = vsub.s32 2, %v274
    %v276 = vrot.slane %v177, %v275
    %v277 = vlaneseq
    %v278 = vshrl.u32 %v277, 7
    %v279 = vsub.s32 3, %v278
    %v280 = vrot.slane %v177, %v279
    %v281 = vlaneseq
    %v282 = vshrl.u32 %v281, 7
    %v283 = vsub.s32 4, %v282
    %v284 = vrot.slane %v177, %v283
    %v285 = vlaneseq
    %v286 = vshrl.u32 %v285, 7
    %v287 = vsub.s32 5, %v286
    %v288 = vrot.slane %v177, %v287
    %v289 = vlaneseq
    %v290 = vshrl.u32 %v289, 7
    %v291 = vsub.s32 6, %v290
    %v292 = vrot.slane %v177, %v291
    %v293 = vlaneseq
    %v294 = vshrl.u32 %v293, 7
    %v295 = vsub.s32 7, %v294
    %v296 = vrot.slane %v177, %v295
    %v297 = vlaneseq
    %v298 = vshrl.u32 %v297, 7
    %v299 = vsub.s32 0, %v298
    %v300 = vrot.slane %v178, %v299
    %v301 = vlaneseq
    %v302 = vshrl.u32 %v301, 7
    %v303 = vsub.s32 1, %v302
    %v304 = vrot.slane %v178, %v303
    %v305 = vlaneseq
    %v306 = vshrl.u32 %v305, 7
    %v307 = vsub.s32 2, %v306
    %v308 = vrot.slane %v178, %v307
    %v309 = vlaneseq
    %v310 = vshrl.u32 %v309, 7
    %v311 = vsub.s32 3, %v310
    %v312 = vrot.slane %v178, %v311
    %v313 = vlaneseq
    %v314 = vshrl.u32 %v313, 7
    %v315 = vsub.s32 4, %v314
    %v316 = vrot.slane %v178, %v315
    %v317 = vlaneseq
    %v318 = vshrl.u32 %v317, 7
    %v319 = vsub.s32 5, %v318
    %v320 = vrot.slane %v178, %v319
    %v321 = vlaneseq
    %v322 = vshrl.u32 %v321, 7
    %v323 = vsub.s32 6, %v322
    %v324 = vrot.slane %v178, %v323
    %v325 = vlaneseq
    %v326 = vshrl.u32 %v325, 7
    %v327 = vsub.s32 7, %v326
    %v328 = vrot.slane %v178, %v327
    %v345 = vsel %vm161, %v186, %v268
    %v346 = vsel %vm162, %v190, %v272
    %v347 = vsel %vm163, %v194, %v276
    %v348 = vsel %vm164, %v198, %v280
    %v349 = vsel %vm165, %v202, %v284
    %v350 = vsel %vm166, %v206, %v288
    %v351 = vsel %vm167, %v210, %v292
    %v352 = vsel %vm168, %v214, %v296
    %v353 = vsel %vm169, %v218, %v300
    %v354 = vsel %vm170, %v222, %v304
    %v355 = vsel %vm171, %v226, %v308
    %v356 = vsel %vm172, %v230, %v312
    %v357 = vsel %vm173, %v234, %v316
    %v358 = vsel %vm174, %v238, %v320
    %v359 = vsel %vm175, %v242, %v324
    %v360 = vsel %vm176, %v246, %v328
    %v377 = vcombine.low %v345, %v346
    %v378 = vcombine.low %v347, %v348
    %v379 = vcombine.low %v349, %v350
    %v380 = vcombine.low %v351, %v352
    %v382 = vunpack.c.l.s4 1966171168
    %v383 = vunpack.c.0.s8 %v382
    %v384 = vlaneseq
    %v385 = vshrl.u32 %v384, 7
    %v386 = vsub.s32 %v383, %v385
    %v387 = vrot.slane %v377, %v386
    %v389 = vunpack.c.l.s4 1966171168
    %v390 = vunpack.c.0.s8 %v389
    %v391 = vlaneseq
    %v392 = vshrl.u32 %v391, 7
    %v393 = vsub.s32 %v390, %v392
    %v394 = vrot.slane %v378, %v393
    %v396 = vunpack.c.l.s4 1966171168
    %v397 = vunpack.c.0.s8 %v396
    %v398 = vlaneseq
    %v399 = vshrl.u32 %v398, 7
    %v400 = vsub.s32 %v397, %v399
    %v401 = vrot.slane %v379, %v400
    %v403 = vunpack.c.l.s4 1966171168
    %v404 = vunpack.c.0.s8 %v403
    %v405 = vlaneseq
    %v406 = vshrl.u32 %v405, 7
    %v407 = vsub.s32 %v404, %v406
    %v408 = vrot.slane %v380, %v407
    %v409 = vcombine.low %v387, %v394
    %v410 = vcombine.low %v401, %v408
    %v412 = vunpack.c.l.s4 1966171168
    %v413 = vunpack.c.0.s8 %v412
    %v414 = vlaneseq
    %v415 = vshrl.u32 %v414, 7
    %v416 = vsub.s32 %v413, %v415
    %v417 = vrot.slane %v409, %v416
    %v419 = vunpack.c.l.s4 1966171168
    %v420 = vunpack.c.0.s8 %v419
    %v421 = vlaneseq
    %v422 = vshrl.u32 %v421, 7
    %v423 = vsub.s32 %v420, %v422
    %v424 = vrot.slane %v410, %v423
    %v425 = vcombine.low %v417, %v424
    %v426 = vcombine.low %v353, %v354
    %v427 = vcombine.low %v355, %v356
    %v428 = vcombine.low %v357, %v358
    %v429 = vcombine.low %v359, %v360
    %v431 = vunpack.c.l.s4 1966171168
    %v432 = vunpack.c.0.s8 %v431
    %v433 = vlaneseq
    %v434 = vshrl.u32 %v433, 7
    %v435 = vsub.s32 %v432, %v434
    %v436 = vrot.slane %v426, %v435
    %v438 = vunpack.c.l.s4 1966171168
    %v439 = vunpack.c.0.s8 %v438
    %v440 = vlaneseq
    %v441 = vshrl.u32 %v440, 7
    %v442 = vsub.s32 %v439, %v441
    %v443 = vrot.slane %v427, %v442
    %v445 = vunpack.c.l.s4 1966171168
    %v446 = vunpack.c.0.s8 %v445
    %v447 = vlaneseq
    %v448 = vshrl.u32 %v447, 7
    %v449 = vsub.s32 %v446, %v448
    %v450 = vrot.slane %v428, %v449
    %v452 = vunpack.c.l.s4 1966171168
    %v453 = vunpack.c.0.s8 %v452
    %v454 = vlaneseq
    %v455 = vshrl.u32 %v454, 7
    %v456 = vsub.s32 %v453, %v455
    %v457 = vrot.slane %v429, %v456
    %v458 = vcombine.low %v436, %v443
    %v459 = vcombine.low %v450, %v457
    %v461 = vunpack.c.l.s4 1966171168
    %v462 = vunpack.c.0.s8 %v461
    %v463 = vlaneseq
    %v464 = vshrl.u32 %v463, 7
    %v465 = vsub.s32 %v462, %v464
    %v466 = vrot.slane %v458, %v465
    %v468 = vunpack.c.l.s4 1966171168
    %v469 = vunpack.c.0.s8 %v468
    %v470 = vlaneseq
    %v471 = vshrl.u32 %v470, 7
    %v472 = vsub.s32 %v469, %v471
    %v473 = vrot.slane %v459, %v472
    %v474 = vcombine.low %v466, %v473
    %477 = vst [vmem:[#allocation5] sm:$0xff] %v425
    %478 = vst [vmem:[#allocation5 + $0x8] sm:$0xff] %v474
    // Predicated region
    $region10: #{tpu_custom_call.1} parent=1 // pred_check
      _
    $region11: #{tpu_custom_call.1} parent=1 // pred_check_branch
      %480 = sbr.rel (0) target = $region13
    $region12: #{tpu_custom_call.1} parent=1 // pred_region
      %s482 = ssub.s32 256, 256
      %483 = vsyncadd [#allocation4], %s482
      %s485 = sshll.u32 [#allocation5], 4
      %s486 = int_to_ptr.vmem [resolvable:$true] %s485
      %488 = dma.vmem_to_hbm [thread:$0]  %s486, 256, %s1, [#allocation4]
    $region13: #{tpu_custom_call.1} parent=1 // pred_fallthru
      _
    // Predicated region
    $region14: #{tpu_custom_call.1} parent=1 // pred_check
      _
    $region15: #{tpu_custom_call.1} parent=1 // pred_check_branch
      %490 = sbr.rel (0) target = $region17
    $region16: #{tpu_custom_call.1} parent=1 // pred_region
      %491 = dma.done [#allocation4], 256
    $region17: #{tpu_custom_call.1} parent=1 // pred_fallthru
      _
    %492 = vsyncpa [#allocation3], 1
    %493 = vsyncpa [#allocation4], 1

</llo_original>
